<compile_context>
chip_gen: v6e
topology: v6e:2x2x1
jax: 0.10.0
libtpu: 0.0.40
codegen_flags: <defaults>
</compile_context>

<pallas_src>
import jax
import jax.numpy as jnp
from jax.experimental import pallas as pl
from jax.experimental.pallas import tpu as pltpu


def relnet_kernel(x_ref, w1_ref, t1_ref, w2_ref, t2_ref, w3_ref, b3_ref, o_ref):
    # fc1 (+ folded bn1) + relu
    h1 = jnp.dot(x_ref[...], w1_ref[...],
                 preferred_element_type=jnp.float32) + t1_ref[...]
    h1 = jnp.maximum(h1, 0.0)

    # fc2 (+ dropout: identity in eval) (+ folded bn2) + relu
    h2 = jnp.dot(h1.astype(w2_ref.dtype), w2_ref[...],
                 preferred_element_type=jnp.float32) + t2_ref[...]
    h2 = jnp.maximum(h2, 0.0)

    # fc3 + softmax over last axis (exact normalization so rows sum to 1)
    logits = jnp.dot(h2.astype(w3_ref.dtype), w3_ref[...],
                     preferred_element_type=jnp.float32) + b3_ref[...]
    m = jnp.max(logits, axis=-1, keepdims=True)
    e = jnp.exp(logits - m)
    denom = jnp.sum(e, axis=-1, keepdims=True)
    o_ref[...] = (e / denom).astype(o_ref.dtype)


def fold_params(params, compute_dtype=jnp.float32, eps=1e-5):
    """Fold eval-mode BatchNorm (scale) and the linear bias into the weights.
    Done ONCE on constants; the kernel only sees W', t'.  Weights are cast to
    `compute_dtype` (e.g. bf16 on v6e/v7x); bias/shift rows stay f32."""
    s1 = params["bn1_g"] / jnp.sqrt(params["bn1_v"] + eps)
    s2 = params["bn2_g"] / jnp.sqrt(params["bn2_v"] + eps)

    w1 = (params["fc1_w"] * s1[None, :]).astype(compute_dtype)
    t1 = (s1 * (params["fc1_b"] - params["bn1_m"]) + params["bn1_b"]).astype(jnp.float32)

    w2 = (params["fc2_w"] * s2[None, :]).astype(compute_dtype)
    t2 = (s2 * (params["fc2_b"] - params["bn2_m"]) + params["bn2_b"]).astype(jnp.float32)

    w3 = params["fc3_w"].astype(compute_dtype)
    b3 = params["fc3_b"].astype(jnp.float32)

    def row(v):  # keep small vectors 2D: [1, F]
        return v.reshape(1, -1)

    return dict(w1=w1, t1=row(t1), w2=w2, t2=row(t2), w3=w3, b3=row(b3),
                compute_dtype=compute_dtype)


def _choose_batch_tile(B, batch_tile):
    if batch_tile is not None:
        assert B % batch_tile == 0, "batch_tile must divide B"
        assert batch_tile % 8 == 0 or batch_tile == B, \
            "batch_tile must be a multiple of 8 (sublane) or the full batch"
        return batch_tile
    # Default: largest divisor of B that is a multiple of 8, capped at 512.
    # 512 keeps per-step VMEM tiny (safe under v7x's 64 MiB) while being fat
    # enough to amortize per-grid-step overhead on single-TC v5e/v6e, and
    # guarantees >= 2 grid steps for B >= 1024 so megacore sharding engages.
    for tb in (512, 256, 128, 64, 32, 16, 8):
        if tb <= B and B % tb == 0:
            return tb
    return B  # tiny / odd batch: one full-batch block (block == full dim is legal)


def relnet_cls_forward(x, folded, *, batch_tile=None):
    """x: [B, in_size] float32.  `folded` from fold_params().
    Returns softmax probs [B, rel_num] in float32."""
    B, in_size = x.shape
    w1, t1, w2, t2, w3, b3 = (folded["w1"], folded["t1"], folded["w2"],
                              folded["t2"], folded["w3"], folded["b3"])
    h1, h2, rel_num = w1.shape[1], w2.shape[1], w3.shape[1]

    tb = _choose_batch_tile(B, batch_tile)
    x_in = x.astype(folded["compute_dtype"])

    out = pl.pallas_call(
        relnet_kernel,
        out_shape=jax.ShapeDtypeStruct((B, rel_num), jnp.float32),
        grid_spec=pltpu.PrefetchScalarGridSpec(
            num_scalar_prefetch=0,
            grid=(B // tb,),
            in_specs=[
                pl.BlockSpec((tb, in_size), lambda i: (i, 0)),      # x tile
                pl.BlockSpec((in_size, h1), lambda i: (0, 0)),      # w1 (bn1-folded)
                pl.BlockSpec((1, h1), lambda i: (0, 0)),            # t1 (bias+bn1 shift)
                pl.BlockSpec((h1, h2), lambda i: (0, 0)),           # w2 (bn2-folded)
                pl.BlockSpec((1, h2), lambda i: (0, 0)),            # t2 (bias+bn2 shift)
                pl.BlockSpec((h2, rel_num), lambda i: (0, 0)),      # w3
                pl.BlockSpec((1, rel_num), lambda i: (0, 0)),       # b3
            ],
            out_specs=pl.BlockSpec((tb, rel_num), lambda i: (i, 0)),
        ),
        compiler_params=pltpu.CompilerParams(
            dimension_semantics=("parallel",)),
    )(x_in, w1, t1, w2, t2, w3, b3)
    return out


def init_params(key, in_size=40, rel_num=6):
    """Deterministic parameter init mirroring the nn.Module shapes.
    Linear weights are stored transposed: [in, out]."""
    ks = jax.random.split(key, 6)

    def linear(kw, kb, fan_in, fan_out):
        bound = 1.0 / jnp.sqrt(fan_in)
        w = jax.random.uniform(kw, (fan_in, fan_out), jnp.float32, -bound, bound)
        b = jax.random.uniform(kb, (fan_out,), jnp.float32, -bound, bound)
        return w, b

    w1, b1 = linear(ks[0], ks[1], in_size, 128)
    w2, b2 = linear(ks[2], ks[3], 128, 64)
    w3, b3 = linear(ks[4], ks[5], 64, rel_num)

    return dict(
        fc1_w=w1, fc1_b=b1,
        bn1_g=jnp.ones((128,), jnp.float32), bn1_b=jnp.zeros((128,), jnp.float32),
        bn1_m=jnp.zeros((128,), jnp.float32), bn1_v=jnp.ones((128,), jnp.float32),
        fc2_w=w2, fc2_b=b2,
        bn2_g=jnp.ones((64,), jnp.float32), bn2_b=jnp.zeros((64,), jnp.float32),
        bn2_m=jnp.zeros((64,), jnp.float32), bn2_v=jnp.ones((64,), jnp.float32),
        fc3_w=w3, fc3_b=b3,
    )


def reference_forward(x, params):
    eps = 1e-5
    h = x @ params["fc1_w"] + params["fc1_b"]
    h = (h - params["bn1_m"]) / jnp.sqrt(params["bn1_v"] + eps) * params["bn1_g"] + params["bn1_b"]
    h = jnp.maximum(h, 0.0)
    h = h @ params["fc2_w"] + params["fc2_b"]
    h = (h - params["bn2_m"]) / jnp.sqrt(params["bn2_v"] + eps) * params["bn2_g"] + params["bn2_b"]
    h = jnp.maximum(h, 0.0)
    logits = h @ params["fc3_w"] + params["fc3_b"]
    return jax.nn.softmax(logits, axis=1)


if __name__ == "__main__":
    key = jax.random.PRNGKey(0)
    k_param, k_x1, k_x2 = jax.random.split(key, 3)

    IN_SIZE, REL_NUM = 40, 6
    params = init_params(k_param, in_size=IN_SIZE, rel_num=REL_NUM)

    # --- small batch, f32 path (single full-batch block) ---
    B_small = 8
    x_small = jax.random.normal(k_x1, (B_small, IN_SIZE), jnp.float32)
    folded_f32 = fold_params(params, compute_dtype=jnp.float32)
    out_small = jax.block_until_ready(relnet_cls_forward(x_small, folded_f32))
    ref_small = reference_forward(x_small, params)
    assert out_small.shape == (B_small, REL_NUM)
    assert jnp.allclose(out_small, ref_small, atol=1e-3, rtol=1e-3)
    assert jnp.allclose(jnp.sum(out_small, axis=1), jnp.ones((B_small,)), atol=1e-3)

    # --- larger batch, f32 path: exercises real tiling/pipelining (grid=4) ---
    B_big = 512
    x_big = jax.random.normal(k_x2, (B_big, IN_SIZE), jnp.float32)
    out_big = jax.block_until_ready(
        relnet_cls_forward(x_big, folded_f32, batch_tile=128))
    ref_big = reference_forward(x_big, params)
    assert out_big.shape == (B_big, REL_NUM)
    assert jnp.allclose(out_big, ref_big, atol=1e-3, rtol=1e-3)
    assert jnp.allclose(jnp.sum(out_big, axis=1), jnp.ones((B_big,)), atol=1e-3)

    # --- larger batch, bf16 compute path (halves the dominant x HBM read) ---
    folded_bf16 = fold_params(params, compute_dtype=jnp.bfloat16)
    out_bf16 = jax.block_until_ready(relnet_cls_forward(x_big, folded_bf16))
    assert out_bf16.shape == (B_big, REL_NUM)
    assert jnp.allclose(out_bf16.astype(jnp.float32), ref_big, atol=2e-2, rtol=2e-2)
    assert jnp.allclose(jnp.sum(out_bf16, axis=1), jnp.ones((B_big,)), atol=1e-3)

    print("KERNEL_OK")
</pallas_src>

<mosaic_0001>
module attributes {stable_mosaic.version = 11 : i64} {
  func.func @relnet_kernel(%arg0: i32, %arg1: memref<8x40xf32, #tpu.memory_space<vmem>>, %arg2: memref<40x128xf32, #tpu.memory_space<vmem>>, %arg3: memref<1x128xf32, #tpu.memory_space<vmem>>, %arg4: memref<128x64xf32, #tpu.memory_space<vmem>>, %arg5: memref<1x64xf32, #tpu.memory_space<vmem>>, %arg6: memref<64x6xf32, #tpu.memory_space<vmem>>, %arg7: memref<1x6xf32, #tpu.memory_space<vmem>>, %arg8: memref<8x6xf32, #tpu.memory_space<vmem>>) attributes {dimension_semantics = [#tpu.dimension_semantics<parallel>], iteration_bounds = array<i64: 1>, scalar_prefetch = 0 : i64, scratch_operands = 0 : i64, tpu.core_type = #tpu.core_type<tc>, window_params = [{transform_indices = @transform_0, window_bounds = array<i64: 8, 40>}, {pipeline_mode = #tpu.pipeline_mode<synchronous>, transform_indices = @transform_1, window_bounds = array<i64: 40, 128>}, {pipeline_mode = #tpu.pipeline_mode<synchronous>, transform_indices = @transform_2, window_bounds = array<i64: 1, 128>}, {pipeline_mode = #tpu.pipeline_mode<synchronous>, transform_indices = @transform_3, window_bounds = array<i64: 128, 64>}, {pipeline_mode = #tpu.pipeline_mode<synchronous>, transform_indices = @transform_4, window_bounds = array<i64: 1, 64>}, {pipeline_mode = #tpu.pipeline_mode<synchronous>, transform_indices = @transform_5, window_bounds = array<i64: 64, 6>}, {pipeline_mode = #tpu.pipeline_mode<synchronous>, transform_indices = @transform_6, window_bounds = array<i64: 1, 6>}, {transform_indices = @transform_7, window_bounds = array<i64: 8, 6>}]} {
    %c0 = arith.constant 0 : index
    %c0_0 = arith.constant 0 : index
    %0 = vector.load %arg1[%c0, %c0_0] : memref<8x40xf32, #tpu.memory_space<vmem>>, vector<8x40xf32>
    %c0_1 = arith.constant 0 : index
    %c0_2 = arith.constant 0 : index
    %1 = vector.load %arg2[%c0_1, %c0_2] : memref<40x128xf32, #tpu.memory_space<vmem>>, vector<40x128xf32>
    %cst = arith.constant dense<0.000000e+00> : vector<8x128xf32>
    %2 = tpu.matmul %0, %1, %cst {dimension_numbers = #tpu.dot_dimension_numbers<[1], [0], [0], [1], [0, 0, 1, 1], [], []>} : vector<8x40xf32>, vector<40x128xf32>, vector<8x128xf32> -> vector<8x128xf32>
    %c0_3 = arith.constant 0 : index
    %c0_4 = arith.constant 0 : index
    %3 = vector.load %arg3[%c0_3, %c0_4] : memref<1x128xf32, #tpu.memory_space<vmem>>, vector<1x128xf32>
    %4 = vector.broadcast %3 : vector<1x128xf32> to vector<8x128xf32>
    %5 = arith.addf %2, %4 : vector<8x128xf32>
    %cst_5 = arith.constant 0.000000e+00 : f32
    %6 = vector.broadcast %cst_5 : f32 to vector<8x128xf32>
    %7 = arith.maximumf %5, %6 : vector<8x128xf32>
    %c0_6 = arith.constant 0 : index
    %c0_7 = arith.constant 0 : index
    %8 = vector.load %arg4[%c0_6, %c0_7] : memref<128x64xf32, #tpu.memory_space<vmem>>, vector<128x64xf32>
    %cst_8 = arith.constant dense<0.000000e+00> : vector<8x64xf32>
    %9 = tpu.matmul %7, %8, %cst_8 {dimension_numbers = #tpu.dot_dimension_numbers<[1], [0], [0], [1], [0, 0, 1, 1], [], []>} : vector<8x128xf32>, vector<128x64xf32>, vector<8x64xf32> -> vector<8x64xf32>
    %c0_9 = arith.constant 0 : index
    %c0_10 = arith.constant 0 : index
    %10 = vector.load %arg5[%c0_9, %c0_10] : memref<1x64xf32, #tpu.memory_space<vmem>>, vector<1x64xf32>
    %11 = vector.broadcast %10 : vector<1x64xf32> to vector<8x64xf32>
    %12 = arith.addf %9, %11 : vector<8x64xf32>
    %cst_11 = arith.constant 0.000000e+00 : f32
    %13 = vector.broadcast %cst_11 : f32 to vector<8x64xf32>
    %14 = arith.maximumf %12, %13 : vector<8x64xf32>
    %c0_12 = arith.constant 0 : index
    %c0_13 = arith.constant 0 : index
    %15 = vector.load %arg6[%c0_12, %c0_13] : memref<64x6xf32, #tpu.memory_space<vmem>>, vector<64x6xf32>
    %cst_14 = arith.constant dense<0.000000e+00> : vector<8x6xf32>
    %16 = tpu.matmul %14, %15, %cst_14 {dimension_numbers = #tpu.dot_dimension_numbers<[1], [0], [0], [1], [0, 0, 1, 1], [], []>} : vector<8x64xf32>, vector<64x6xf32>, vector<8x6xf32> -> vector<8x6xf32>
    %c0_15 = arith.constant 0 : index
    %c0_16 = arith.constant 0 : index
    %17 = vector.load %arg7[%c0_15, %c0_16] : memref<1x6xf32, #tpu.memory_space<vmem>>, vector<1x6xf32>
    %18 = vector.broadcast %17 : vector<1x6xf32> to vector<8x6xf32>
    %19 = arith.addf %16, %18 : vector<8x6xf32>
    %cst_17 = arith.constant dense<0xFF800000> : vector<8xf32>
    %20 = vector.multi_reduction <maximumf>, %19, %cst_17 [1] : vector<8x6xf32> to vector<8xf32>
    %21 = vector.shape_cast %20 : vector<8xf32> to vector<8x1xf32>
    %22 = vector.broadcast %21 : vector<8x1xf32> to vector<8x6xf32>
    %23 = arith.subf %19, %22 : vector<8x6xf32>
    %24 = math.exp %23 : vector<8x6xf32>
    %cst_18 = arith.constant dense<0.000000e+00> : vector<8xf32>
    %25 = vector.multi_reduction <add>, %24, %cst_18 [1] : vector<8x6xf32> to vector<8xf32>
    %26 = vector.shape_cast %25 : vector<8xf32> to vector<8x1xf32>
    %27 = vector.broadcast %26 : vector<8x1xf32> to vector<8x6xf32>
    %28 = arith.divf %24, %27 : vector<8x6xf32>
    %c0_19 = arith.constant 0 : index
    %c0_20 = arith.constant 0 : index
    %29 = vector.load %arg8[%c0_19, %c0_20] : memref<8x6xf32, #tpu.memory_space<vmem>>, vector<8x6xf32>
    tpu.vector_store %arg8[%c0_19, %c0_20], %28 {strides = array<i32>} : memref<8x6xf32, #tpu.memory_space<vmem>>, vector<8x6xf32>,
    return
  }
  func.func @transform_0(%arg0: i32) -> (i32, i32) {
    %c0_i32 = arith.constant 0 : i32
    %c0_i32_0 = arith.constant 0 : i32
    return %arg0, %c0_i32 : i32, i32
  }
  func.func @transform_1(%arg0: i32) -> (i32, i32) {
    %c0_i32 = arith.constant 0 : i32
    %c0_i32_0 = arith.constant 0 : i32
    %c0_i32_1 = arith.constant 0 : i32
    return %c0_i32, %c0_i32_0 : i32, i32
  }
  func.func @transform_2(%arg0: i32) -> (i32, i32) {
    %c0_i32 = arith.constant 0 : i32
    %c0_i32_0 = arith.constant 0 : i32
    %c0_i32_1 = arith.constant 0 : i32
    return %c0_i32, %c0_i32_0 : i32, i32
  }
  func.func @transform_3(%arg0: i32) -> (i32, i32) {
    %c0_i32 = arith.constant 0 : i32
    %c0_i32_0 = arith.constant 0 : i32
    %c0_i32_1 = arith.constant 0 : i32
    return %c0_i32, %c0_i32_0 : i32, i32
  }
  func.func @transform_4(%arg0: i32) -> (i32, i32) {
    %c0_i32 = arith.constant 0 : i32
    %c0_i32_0 = arith.constant 0 : i32
    %c0_i32_1 = arith.constant 0 : i32
    return %c0_i32, %c0_i32_0 : i32, i32
  }
  func.func @transform_5(%arg0: i32) -> (i32, i32) {
    %c0_i32 = arith.constant 0 : i32
    %c0_i32_0 = arith.constant 0 : i32
    %c0_i32_1 = arith.constant 0 : i32
    return %c0_i32, %c0_i32_0 : i32, i32
  }
  func.func @transform_6(%arg0: i32) -> (i32, i32) {
    %c0_i32 = arith.constant 0 : i32
    %c0_i32_0 = arith.constant 0 : i32
    %c0_i32_1 = arith.constant 0 : i32
    return %c0_i32, %c0_i32_0 : i32, i32
  }
  func.func @transform_7(%arg0: i32) -> (i32, i32) {
    %c0_i32 = arith.constant 0 : i32
    %c0_i32_0 = arith.constant 0 : i32
    return %arg0, %c0_i32 : i32, i32
  }
}

</mosaic_0001>

<llo_original>
// kernel: tpu_custom_call.1
$region0: #{tpu_custom_call.1}
  #allocation0 [shape = 'u32[]', space=smem, size = 0x4, offset = 0x4, fixed_abs, tag = 'smem constant byte address 0x4 - core index']
  #allocation1 [shape = 'u32[144,128]{1,0:T(1,128)}', space=vmem, size = 0x12000, scoped, tag = 'internal scratch']
  %s0 = inlined_call_operand.vmem [shape: f32[8,40], index: 0, kind: input, shape index: {}]
  %s1 = inlined_call_operand.vmem [shape: f32[40,128], index: 1, kind: input, shape index: {}]
  %s2 = inlined_call_operand.vmem [shape: f32[1,128], index: 2, kind: input, shape index: {}]
  %s3 = inlined_call_operand.vmem [shape: f32[128,64], index: 3, kind: input, shape index: {}]
  %s4 = inlined_call_operand.vmem [shape: f32[1,64], index: 4, kind: input, shape index: {}]
  %s5 = inlined_call_operand.vmem [shape: f32[64,6], index: 5, kind: input, shape index: {}]
  %s6 = inlined_call_operand.vmem [shape: f32[1,6], index: 6, kind: input, shape index: {}]
  %s7 = inlined_call_operand.hbm [shape: f32[8,6], index: 7, kind: output, shape index: {}]
  %s8 = sld [smem:[#allocation0]]
  $region38: #{tpu_custom_call.1} parent=0
    _
  %s10 = ssub.s32 1, %s8
  %s11 = scalar_select 0, %s10, %s8
  $region1: #{tpu_custom_call.1} parent=0
    #allocation2 [shape = 'u8[4096]{0}', space=vmem, size = 0x1000, scoped, tag = 'output window, operand 0, single buffered']
    #allocation3 [shape = 's32[1]{0}', space=sflag, size = 0x4, scoped, tag = 'scoped memory for tpu_custom_call.1']
    %12 = vsyncpa [#allocation3], 0
    // Predicated region
    $region2: #{tpu_custom_call.1} parent=1 // pred_check
      _
    $region3: #{tpu_custom_call.1} parent=1 // pred_check_branch
      %14 = sbr.rel (0) target = $region5
    $region4: #{tpu_custom_call.1} parent=1 // pred_region
      _
    $region5: #{tpu_custom_call.1} parent=1 // pred_fallthru
      _
    // Predicated region
    $region6: #{tpu_custom_call.1} parent=1 // pred_check
      _
    $region7: #{tpu_custom_call.1} parent=1 // pred_check_branch
      %16 = sbr.rel (0) target = $region9
    $region8: #{tpu_custom_call.1} parent=1 // pred_region
      _
    $region9: #{tpu_custom_call.1} parent=1 // pred_fallthru
      _
    // Predicated region
    $region10: #{tpu_custom_call.1} parent=1 // pred_check
      _
    $region11: #{tpu_custom_call.1} parent=1 // pred_check_branch
      %18 = sbr.rel (0) target = $region13
    $region12: #{tpu_custom_call.1} parent=1 // pred_region
      _
    $region13: #{tpu_custom_call.1} parent=1 // pred_fallthru
      _
    // Predicated region
    $region14: #{tpu_custom_call.1} parent=1 // pred_check
      _
    $region15: #{tpu_custom_call.1} parent=1 // pred_check_branch
      %20 = sbr.rel (0) target = $region17
    $region16: #{tpu_custom_call.1} parent=1 // pred_region
      _
    $region17: #{tpu_custom_call.1} parent=1 // pred_fallthru
      _
    // Predicated region
    $region18: #{tpu_custom_call.1} parent=1 // pred_check
      _
    $region19: #{tpu_custom_call.1} parent=1 // pred_check_branch
      %22 = sbr.rel (0) target = $region21
    $region20: #{tpu_custom_call.1} parent=1 // pred_region
      _
    $region21: #{tpu_custom_call.1} parent=1 // pred_fallthru
      _
    // Predicated region
    $region22: #{tpu_custom_call.1} parent=1 // pred_check
      _
    $region23: #{tpu_custom_call.1} parent=1 // pred_check_branch
      %24 = sbr.rel (0) target = $region25
    $region24: #{tpu_custom_call.1} parent=1 // pred_region
      _
    $region25: #{tpu_custom_call.1} parent=1 // pred_fallthru
      _
    // Predicated region
    $region26: #{tpu_custom_call.1} parent=1 // pred_check
      _
    $region27: #{tpu_custom_call.1} parent=1 // pred_check_branch
      %26 = sbr.rel (0) target = $region29
    $region28: #{tpu_custom_call.1} parent=1 // pred_region
      _
    $region29: #{tpu_custom_call.1} parent=1 // pred_fallthru
      _
    %v27 = vld [vmem:[%s0] sm:$0xff]
    %v28 = vld [vmem:[%s1] sm:$0xff]
    %v29 = vld [vmem:[%s1 + $0x8] sm:$0xff]
    %v30 = vld [vmem:[%s1 + $0x10] sm:$0xff]
    %v31 = vld [vmem:[%s1 + $0x18] sm:$0xff]
    %v32 = vld [vmem:[%s1 + $0x20] sm:$0xff]
    %v33 = vld [vmem:[%s2] sm:$0x1]
    %v35 = vlaneseq
    %v36 = vshrl.u32 %v35, 7
    %v37 = vsub.s32 0, %v36
    %v38 = vrot.slane %v33, %v37
    %vm40 = vcmask 326656
    %v42 = vsel %vm40, %v27, 0
    %44 = vmatprep.subr.mxu0 0.0
    %45 = vmatpush1.msra.mxu0 0.0
    %46 = vmatprep.subr.mxu0 0.0
    %47 = vmatpush1.msra.mxu0 0.0
    %48 = vmatprep.subr.mxu0 0.0
    %49 = vmatpush1.msra.mxu0 0.0
    %50 = vmatprep.subr.mxu0 0.0
    %51 = vmatpush1.msra.mxu0 0.0
    %52 = vmatprep.subr.mxu0 0.0
    %53 = vmatpush1.msra.mxu0 0.0
    %54 = vmatprep.subr.mxu0 0.0
    %55 = vmatpush1.msra.mxu0 0.0
    %56 = vmatprep.subr.mxu0 0.0
    %57 = vmatpush1.msra.mxu0 0.0
    %58 = vmatprep.subr.mxu0 0.0
    %59 = vmatpush1.msra.mxu0 0.0
    %60 = vmatprep.subr.mxu0 0.0
    %61 = vmatpush1.msra.mxu0 0.0
    %62 = vmatprep.subr.mxu0 0.0
    %63 = vmatpush1.msra.mxu0 0.0
    %64 = vmatprep.subr.mxu0 0.0
    %65 = vmatpush1.msra.mxu0 0.0
    %66 = vmatprep.subr.mxu0 0.0
    %67 = vmatpush1.msra.mxu0 %v32
    %68 = vmatprep.subr.mxu0 0.0
    %69 = vmatpush1.msra.mxu0 %v31
    %70 = vmatprep.subr.mxu0 0.0
    %71 = vmatpush1.msra.mxu0 %v30
    %72 = vmatprep.subr.mxu0 0.0
    %73 = vmatpush1.msra.mxu0 %v29
    %74 = vmatprep.subr.mxu0 0.0
    %75 = vmatpush1.msra.mxu0 %v28
    %76 = vmatprep.subr.mxu0 0.0
    %77 = vmatpush2.msra.mxu0 0.0
    %78 = vmatprep.subr.mxu0 0.0
    %79 = vmatpush2.msra.mxu0 0.0
    %80 = vmatprep.subr.mxu0 0.0
    %81 = vmatpush2.msra.mxu0 0.0
    %82 = vmatprep.subr.mxu0 0.0
    %83 = vmatpush2.msra.mxu0 0.0
    %84 = vmatprep.subr.mxu0 0.0
    %85 = vmatpush2.msra.mxu0 0.0
    %86 = vmatprep.subr.mxu0 0.0
    %87 = vmatpush2.msra.mxu0 0.0
    %88 = vmatprep.subr.mxu0 0.0
    %89 = vmatpush2.msra.mxu0 0.0
    %90 = vmatprep.subr.mxu0 0.0
    %91 = vmatpush2.msra.mxu0 0.0
    %92 = vmatprep.subr.mxu0 0.0
    %93 = vmatpush2.msra.mxu0 0.0
    %94 = vmatprep.subr.mxu0 0.0
    %95 = vmatpush2.msra.mxu0 0.0
    %96 = vmatprep.subr.mxu0 0.0
    %97 = vmatpush2.msra.mxu0 0.0
    %98 = vmatprep.subr.mxu0 0.0
    %99 = vmatpush2.msra.mxu0 0.0
    %100 = vmatprep.subr.mxu0 0.0
    %101 = vmatpush2.msra.mxu0 0.0
    %102 = vmatprep.subr.mxu0 0.0
    %103 = vmatpush2.msra.mxu0 0.0
    %104 = vmatprep.subr.mxu0 0.0
    %105 = vmatpush2.msra.mxu0 0.0
    %106 = vmatprep.subr.mxu0 0.0
    %107 = vmatpush2.msra.mxu0 0.0
    %108 = vmatprep.mubr.f32.mxu0 0.0
    %109 = vmatmul.mubr.f32.gmra.mxu0 %v42
    %v110 = vpop.f32.mrf.mxu0
    %v111 = vadd.f32 %v38, %v110
    %v112 = vpop.f32.mrf.mxu0
    %113 = vdwg.mxu0
    %v114 = vmax.f32 %v111, 0.0
    %v115 = vld [vmem:[%s3] sm:$0xff]
    %v116 = vld [vmem:[%s3 + $0x8] sm:$0xff]
    %v117 = vld [vmem:[%s3 + $0x10] sm:$0xff]
    %v118 = vld [vmem:[%s3 + $0x18] sm:$0xff]
    %v119 = vld [vmem:[%s3 + $0x20] sm:$0xff]
    %v120 = vld [vmem:[%s3 + $0x28] sm:$0xff]
    %v121 = vld [vmem:[%s3 + $0x30] sm:$0xff]
    %v122 = vld [vmem:[%s3 + $0x38] sm:$0xff]
    %v123 = vld [vmem:[%s3 + $0x40] sm:$0xff]
    %v124 = vld [vmem:[%s3 + $0x48] sm:$0xff]
    %v125 = vld [vmem:[%s3 + $0x50] sm:$0xff]
    %v126 = vld [vmem:[%s3 + $0x58] sm:$0xff]
    %v127 = vld [vmem:[%s3 + $0x60] sm:$0xff]
    %v128 = vld [vmem:[%s3 + $0x68] sm:$0xff]
    %v129 = vld [vmem:[%s3 + $0x70] sm:$0xff]
    %v130 = vld [vmem:[%s3 + $0x78] sm:$0xff]
    %v131 = vld [vmem:[%s4] sm:$0x1]
    %v133 = vlaneseq
    %v134 = vshrl.u32 %v133, 7
    %v135 = vsub.s32 0, %v134
    %v136 = vrot.slane %v131, %v135
    %138 = vmatprep.subr.mxu0 0.0
    %139 = vmatpush1.msra.mxu0 %v130
    %140 = vmatprep.subr.mxu0 0.0
    %141 = vmatpush1.msra.mxu0 %v129
    %142 = vmatprep.subr.mxu0 0.0
    %143 = vmatpush1.msra.mxu0 %v128
    %144 = vmatprep.subr.mxu0 0.0
    %145 = vmatpush1.msra.mxu0 %v127
    %146 = vmatprep.subr.mxu0 0.0
    %147 = vmatpush1.msra.mxu0 %v126
    %148 = vmatprep.subr.mxu0 0.0
    %149 = vmatpush1.msra.mxu0 %v125
    %150 = vmatprep.subr.mxu0 0.0
    %151 = vmatpush1.msra.mxu0 %v124
    %152 = vmatprep.subr.mxu0 0.0
    %153 = vmatpush1.msra.mxu0 %v123
    %154 = vmatprep.subr.mxu0 0.0
    %155 = vmatpush1.msra.mxu0 %v122
    %156 = vmatprep.subr.mxu0 0.0
    %157 = vmatpush1.msra.mxu0 %v121
    %158 = vmatprep.subr.mxu0 0.0
    %159 = vmatpush1.msra.mxu0 %v120
    %160 = vmatprep.subr.mxu0 0.0
    %161 = vmatpush1.msra.mxu0 %v119
    %162 = vmatprep.subr.mxu0 0.0
    %163 = vmatpush1.msra.mxu0 %v118
    %164 = vmatprep.subr.mxu0 0.0
    %165 = vmatpush1.msra.mxu0 %v117
    %166 = vmatprep.subr.mxu0 0.0
    %167 = vmatpush1.msra.mxu0 %v116
    %168 = vmatprep.subr.mxu0 0.0
    %169 = vmatpush1.msra.mxu0 %v115
    %170 = vmatprep.subr.mxu0 0.0
    %171 = vmatpush2.msra.mxu0 0.0
    %172 = vmatprep.subr.mxu0 0.0
    %173 = vmatpush2.msra.mxu0 0.0
    %174 = vmatprep.subr.mxu0 0.0
    %175 = vmatpush2.msra.mxu0 0.0
    %176 = vmatprep.subr.mxu0 0.0
    %177 = vmatpush2.msra.mxu0 0.0
    %178 = vmatprep.subr.mxu0 0.0
    %179 = vmatpush2.msra.mxu0 0.0
    %180 = vmatprep.subr.mxu0 0.0
    %181 = vmatpush2.msra.mxu0 0.0
    %182 = vmatprep.subr.mxu0 0.0
    %183 = vmatpush2.msra.mxu0 0.0
    %184 = vmatprep.subr.mxu0 0.0
    %185 = vmatpush2.msra.mxu0 0.0
    %186 = vmatprep.subr.mxu0 0.0
    %187 = vmatpush2.msra.mxu0 0.0
    %188 = vmatprep.subr.mxu0 0.0
    %189 = vmatpush2.msra.mxu0 0.0
    %190 = vmatprep.subr.mxu0 0.0
    %191 = vmatpush2.msra.mxu0 0.0
    %192 = vmatprep.subr.mxu0 0.0
    %193 = vmatpush2.msra.mxu0 0.0
    %194 = vmatprep.subr.mxu0 0.0
    %195 = vmatpush2.msra.mxu0 0.0
    %196 = vmatprep.subr.mxu0 0.0
    %197 = vmatpush2.msra.mxu0 0.0
    %198 = vmatprep.subr.mxu0 0.0
    %199 = vmatpush2.msra.mxu0 0.0
    %200 = vmatprep.subr.mxu0 0.0
    %201 = vmatpush2.msra.mxu0 0.0
    %202 = vmatprep.mubr.f32.mxu0 0.0
    %203 = vmatmul.mubr.f32.gmra.mxu0 %v114
    %v204 = vpop.f32.mrf.mxu0
    %v205 = vadd.f32 %v136, %v204
    %v206 = vpop.f32.mrf.mxu0
    %207 = vdwg.mxu0
    %v208 = vmax.f32 %v205, 0.0
    %v209 = vld [vmem:[%s5] sm:$0xff]
    %v210 = vld [vmem:[%s5 + $0x8] sm:$0xff]
    %v211 = vld [vmem:[%s5 + $0x10] sm:$0xff]
    %v212 = vld [vmem:[%s5 + $0x18] sm:$0xff]
    %v213 = vld [vmem:[%s5 + $0x20] sm:$0xff]
    %v214 = vld [vmem:[%s5 + $0x28] sm:$0xff]
    %v215 = vld [vmem:[%s5 + $0x30] sm:$0xff]
    %v216 = vld [vmem:[%s5 + $0x38] sm:$0xff]
    %v217 = vld [vmem:[%s6] sm:$0x1]
    %v219 = vlaneseq
    %v220 = vshrl.u32 %v219, 7
    %v221 = vsub.s32 0, %v220
    %v222 = vrot.slane %v217, %v221
    %vm224 = vcmask 523264
    %v226 = vsel %vm224, %v208, 0
    %228 = vmatprep.subr.mxu0 0.0
    %229 = vmatpush1.msra.mxu0 0.0
    %230 = vmatprep.subr.mxu0 0.0
    %231 = vmatpush1.msra.mxu0 0.0
    %232 = vmatprep.subr.mxu0 0.0
    %233 = vmatpush1.msra.mxu0 0.0
    %234 = vmatprep.subr.mxu0 0.0
    %235 = vmatpush1.msra.mxu0 0.0
    %236 = vmatprep.subr.mxu0 0.0
    %237 = vmatpush1.msra.mxu0 0.0
    %238 = vmatprep.subr.mxu0 0.0
    %239 = vmatpush1.msra.mxu0 0.0
    %240 = vmatprep.subr.mxu0 0.0
    %241 = vmatpush1.msra.mxu0 0.0
    %242 = vmatprep.subr.mxu0 0.0
    %243 = vmatpush1.msra.mxu0 0.0
    %244 = vmatprep.subr.mxu0 0.0
    %245 = vmatpush1.msra.mxu0 %v216
    %246 = vmatprep.subr.mxu0 0.0
    %247 = vmatpush1.msra.mxu0 %v215
    %248 = vmatprep.subr.mxu0 0.0
    %249 = vmatpush1.msra.mxu0 %v214
    %250 = vmatprep.subr.mxu0 0.0
    %251 = vmatpush1.msra.mxu0 %v213
    %252 = vmatprep.subr.mxu0 0.0
    %253 = vmatpush1.msra.mxu0 %v212
    %254 = vmatprep.subr.mxu0 0.0
    %255 = vmatpush1.msra.mxu0 %v211
    %256 = vmatprep.subr.mxu0 0.0
    %257 = vmatpush1.msra.mxu0 %v210
    %258 = vmatprep.subr.mxu0 0.0
    %259 = vmatpush1.msra.mxu0 %v209
    %260 = vmatprep.subr.mxu0 0.0
    %261 = vmatpush2.msra.mxu0 0.0
    %262 = vmatprep.subr.mxu0 0.0
    %263 = vmatpush2.msra.mxu0 0.0
    %264 = vmatprep.subr.mxu0 0.0
    %265 = vmatpush2.msra.mxu0 0.0
    %266 = vmatprep.subr.mxu0 0.0
    %267 = vmatpush2.msra.mxu0 0.0
    %268 = vmatprep.subr.mxu0 0.0
    %269 = vmatpush2.msra.mxu0 0.0
    %270 = vmatprep.subr.mxu0 0.0
    %271 = vmatpush2.msra.mxu0 0.0
    %272 = vmatprep.subr.mxu0 0.0
    %273 = vmatpush2.msra.mxu0 0.0
    %274 = vmatprep.subr.mxu0 0.0
    %275 = vmatpush2.msra.mxu0 0.0
    %276 = vmatprep.subr.mxu0 0.0
    %277 = vmatpush2.msra.mxu0 0.0
    %278 = vmatprep.subr.mxu0 0.0
    %279 = vmatpush2.msra.mxu0 0.0
    %280 = vmatprep.subr.mxu0 0.0
    %281 = vmatpush2.msra.mxu0 0.0
    %282 = vmatprep.subr.mxu0 0.0
    %283 = vmatpush2.msra.mxu0 0.0
    %284 = vmatprep.subr.mxu0 0.0
    %285 = vmatpush2.msra.mxu0 0.0
    %286 = vmatprep.subr.mxu0 0.0
    %287 = vmatpush2.msra.mxu0 0.0
    %288 = vmatprep.subr.mxu0 0.0
    %289 = vmatpush2.msra.mxu0 0.0
    %290 = vmatprep.subr.mxu0 0.0
    %291 = vmatpush2.msra.mxu0 0.0
    %292 = vmatprep.mubr.f32.mxu0 0.0
    %293 = vmatmul.mubr.f32.gmra.mxu0 %v226
    %v294 = vpop.f32.mrf.mxu0
    %v295 = vadd.f32 %v222, %v294
    %v296 = vpop.f32.mrf.mxu0
    %297 = vdwg.mxu0
    %vm298 = vcmask 48128
    %v299 = vsel %vm298, %v295, -inf
    %300 = vmax.xlane.f32.xlu0 %v299
    %v301 = vpop.xlane.xlu0 %300
    %v302 = vsub.f32 %v295, %v301
    %v303 = vmul.f32 %v302, 1.442695
    %v304 = vpow.pop %v303
    %v305 = vsel %vm298, %v304, 0.0
    %306 = vadd.xlane.f32.xlu0 %v305
    %v307 = vpop.xlane.xlu0 %306
    %v308 = vrcp.pop %v307
    %v309 = vmul.f32 %v304, %v308
    %310 = vst.msk [vmem:[#allocation2] sm:$0xff] %vm298, %v309
    // Predicated region
    $region30: #{tpu_custom_call.1} parent=1 // pred_check
      _
    $region31: #{tpu_custom_call.1} parent=1 // pred_check_branch
      %312 = sbr.rel (0) target = $region33
    $region32: #{tpu_custom_call.1} parent=1 // pred_region
      %s314 = ssub.s32 128, 128
      %315 = vsyncadd [#allocation3], %s314
      %s317 = sshll.u32 [#allocation2], 4
      %s318 = int_to_ptr.vmem [resolvable:$true] %s317
      %320 = dma.vmem_to_hbm [thread:$0]  %s318, 128, %s7, [#allocation3]
    $region33: #{tpu_custom_call.1} parent=1 // pred_fallthru
      _
    // Predicated region
    $region34: #{tpu_custom_call.1} parent=1 // pred_check
      _
    $region35: #{tpu_custom_call.1} parent=1 // pred_check_branch
      %322 = sbr.rel (0) target = $region37
    $region36: #{tpu_custom_call.1} parent=1 // pred_region
      %323 = dma.done [#allocation3], 128
    $region37: #{tpu_custom_call.1} parent=1 // pred_fallthru
      _
    %324 = vsyncpa [#allocation3], 1

</llo_original>
